<compile_context>
chip_gen: v7x
topology: tpu7x:2x2x1
jax: 0.10.0
libtpu: 0.0.40
codegen_flags: <defaults>
</compile_context>

<pallas_src>
import jax
import jax.numpy as jnp
from jax.experimental import pallas as pl
from jax.experimental.pallas import tpu as pltpu

LANE = 128
SUB = 8
NEG = -1.0e30                     # additive-mask sentinel (safe: h >= 0 after ReLU)
VMEM_LIMIT = 48 * 1024 * 1024     # < 64 MiB physical VMEM on v7x, > 32 MiB scoped default


def _round_up(x, m):
    return (x + m - 1) // m * m


# ---------------------------------------------------------------------------
# SAGEConv layer:  H = relu([A @ X | X] @ [W_l ; W_r] + b), tiled over node rows.
# grid = (N_pad // tile, N_pad // tile);  row axis "parallel", reduce axis "arbitrary".
# ---------------------------------------------------------------------------
def sage_kernel(a_ref, xcol_ref, xrow_ref, w_ref, b_ref, h_ref, cat_ref):
    cp = xcol_ref.shape[1]
    k = pl.program_id(1)

    @pl.when(k == 0)
    def _():
        cat_ref[:, 0:cp] = jnp.zeros((cat_ref.shape[0], cp), jnp.float32)

    # mean-aggregation partial sum (bf16 MXU inputs, f32 accumulation)
    cat_ref[:, 0:cp] = cat_ref[:, 0:cp] + jnp.dot(
        a_ref[...], xcol_ref[...], preferred_element_type=jnp.float32)

    @pl.when(k == pl.num_programs(1) - 1)
    def _():
        # self features into the upper Cp lanes -> single fused K = 2*Cp projection
        cat_ref[:, cp:2 * cp] = xrow_ref[...].astype(jnp.float32)
        h = jnp.dot(cat_ref[...].astype(jnp.bfloat16), w_ref[...],
                    preferred_element_type=jnp.float32) + b_ref[...]
        h_ref[...] = jnp.maximum(h, 0.0).astype(h_ref.dtype)


def sage_layer(adj_bf16, x_bf16, w_fused_bf16, b_f32, *, tile=128):
    n_pad, cp = x_bf16.shape
    grid = (n_pad // tile, n_pad // tile)
    return pl.pallas_call(
        sage_kernel,
        out_shape=jax.ShapeDtypeStruct((n_pad, cp), jnp.bfloat16),
        grid_spec=pltpu.PrefetchScalarGridSpec(
            num_scalar_prefetch=0,
            grid=grid,
            in_specs=[
                pl.BlockSpec((tile, tile), lambda i, k: (i, k)),      # A tile
                pl.BlockSpec((tile, cp), lambda i, k: (k, 0)),        # X column block
                pl.BlockSpec((tile, cp), lambda i, k: (i, 0)),        # X row block (self)
                pl.BlockSpec((2 * cp, cp), lambda i, k: (0, 0)),      # [W_l ; W_r]
                pl.BlockSpec((1, cp), lambda i, k: (0, 0)),           # bias
            ],
            out_specs=pl.BlockSpec((tile, cp), lambda i, k: (i, 0)),
            scratch_shapes=[pltpu.VMEM((tile, 2 * cp), jnp.float32)],
        ),
        compiler_params=pltpu.CompilerParams(
            dimension_semantics=("parallel", "arbitrary"),
            vmem_limit_bytes=VMEM_LIMIT),
    )(adj_bf16, x_bf16, x_bf16, w_fused_bf16, b_f32)


# ---------------------------------------------------------------------------
# Tail: global_max_pool (additive mask) + MLP head + log_softmax.  G is tiny,
# so this runs grid-less with everything resident in VMEM (f32).
# ---------------------------------------------------------------------------
def head_kernel(h_ref, addmask_ref, clsmask_ref,
                wl1_ref, bl1_ref, wl2_ref, bl2_ref, wl3_ref, bl3_ref,
                out_ref):
    f32 = jnp.float32
    h = h_ref[...].astype(f32)          # [N_pad, Cp]
    am = addmask_ref[...]               # [N_pad, G]   (0 for member, -1e30 otherwise)
    g_count = am.shape[1]               # static, small; Python loop unrolled at trace
    g_pad = out_ref.shape[0]            # sublane-padded row count (multiple of 8)
    cp = h.shape[1]

    rows = []
    for g in range(g_count):
        rows.append(jnp.max(h + am[:, g:g + 1], axis=0, keepdims=True))     # [1, Cp]
    if g_pad > g_count:                 # pad pooled slab to 8 sublanes (zeros rows)
        rows.append(jnp.zeros((g_pad - g_count, cp), f32))
    pooled = jnp.concatenate(rows, axis=0)                                   # [G_pad, Cp]

    z = jnp.maximum(
        jnp.dot(pooled, wl1_ref[...], preferred_element_type=f32) + bl1_ref[...], 0.0)
    z = jnp.maximum(
        jnp.dot(z, wl2_ref[...], preferred_element_type=f32) + bl2_ref[...], 0.0)
    z = jnp.dot(z, wl3_ref[...], preferred_element_type=f32) + bl3_ref[...]
    z = z + clsmask_ref[...]            # mask out padded classes before softmax

    mx = jnp.max(z, axis=1, keepdims=True)
    sh = z - mx
    lse = jnp.log(jnp.sum(jnp.exp(sh), axis=1, keepdims=True))
    out_ref[...] = sh - lse             # [G_pad, Kp] unmasked lane-dense store


# ---------------------------------------------------------------------------
# Wrapper: build padded dense operators + padded/fused weights, call kernels.
# ---------------------------------------------------------------------------
def persgraph_forward(x, edge_index, batch, params, num_graphs, n_characters,
                      *, tile=128):
    n, c = x.shape
    cp = _round_up(c, LANE)
    n_pad = _round_up(n, tile)
    kp = _round_up(n_characters, LANE)
    g_pad = _round_up(max(num_graphs, SUB), SUB)

    # Dense row-normalized mean-aggregation matrix, zero-padded, bf16.
    # TODO(synk): at large N replace dense A with scalar-prefetched neighbor
    # offsets + DMA gather / segment-sum (E << N^2 for real chat graphs).
    src, dst = edge_index[0], edge_index[1]
    adj = jnp.zeros((n_pad, n_pad), jnp.float32).at[dst, src].add(1.0)
    deg = jnp.clip(jnp.sum(adj, axis=1, keepdims=True), 1.0, None)
    adj = (adj / deg).astype(jnp.bfloat16)

    # Node features zero-padded to [N_pad, Cp], bf16 for the conv path.
    xp = jnp.zeros((n_pad, cp), jnp.bfloat16).at[:n, :c].set(x.astype(jnp.bfloat16))

    def pad2(w, rows, cols):
        return jnp.zeros((rows, cols), jnp.float32).at[:w.shape[0], :w.shape[1]].set(w)

    # Fused SAGE weights [W_l ; W_r] -> [2*Cp, Cp], bf16.
    w1 = jnp.concatenate([pad2(params["w1l"], cp, cp),
                          pad2(params["w1r"], cp, cp)], axis=0).astype(jnp.bfloat16)
    w2 = jnp.concatenate([pad2(params["w2l"], cp, cp),
                          pad2(params["w2r"], cp, cp)], axis=0).astype(jnp.bfloat16)
    b1 = pad2(params["b1"], 1, cp)
    b2 = pad2(params["b2"], 1, cp)

    # MLP head weights, lane-padded, kept in f32.
    wl1 = pad2(params["wl1"], cp, 128)
    bl1 = pad2(params["bl1"], 1, 128)
    wl2 = pad2(params["wl2"], 128, 128)
    bl2 = pad2(params["bl2"], 1, 128)
    wl3 = pad2(params["wl3"], 128, kp)
    bl3 = pad2(params["bl3"], 1, kp)

    # Additive pooling mask [N_pad, G]: 0 for member nodes, -1e30 otherwise
    # (padded nodes belong to no graph).
    batch_pad = jnp.full((n_pad,), -1, jnp.int32).at[:n].set(batch.astype(jnp.int32))
    member = batch_pad[:, None] == jnp.arange(num_graphs, dtype=jnp.int32)[None, :]
    addmask = jnp.where(member, 0.0, NEG).astype(jnp.float32)

    # Additive class mask [1, Kp]: 0 for real classes, -1e30 for padded classes.
    clsmask = jnp.where(jnp.arange(kp) < n_characters, 0.0, NEG
                        ).astype(jnp.float32)[None, :]

    # ---- two SAGEConv layers (tiled, pipelined) ----
    h1 = sage_layer(adj, xp, w1, b1, tile=tile)
    # TODO(synk): Dropout(p=0.2) is identity in eval mode; training-mode masking not implemented.
    h2 = sage_layer(adj, h1, w2, b2, tile=tile)

    # ---- pooling + MLP + log_softmax tail (single grid-less call) ----
    vmem_spec = pl.BlockSpec(memory_space=pltpu.MemorySpace.VMEM)
    out_pad = pl.pallas_call(
        head_kernel,
        out_shape=jax.ShapeDtypeStruct((g_pad, kp), jnp.float32),
        in_specs=[vmem_spec] * 9,
        out_specs=vmem_spec,
        compiler_params=pltpu.CompilerParams(vmem_limit_bytes=VMEM_LIMIT),
    )(h2, addmask, clsmask, wl1, bl1, wl2, bl2, wl3, bl3)

    return out_pad[:num_graphs, :n_characters]


def init_params(key, in_channels, n_characters):
    """Deterministic normal(0,1) init, mirroring the module's _init_weights shapes."""
    ks = jax.random.split(key, 12)
    C = in_channels
    n = jax.random.normal
    return {
        # SAGEConv 1 (lin_l has bias, lin_r has no bias)
        "w1l": n(ks[0], (C, C), jnp.float32),
        "w1r": n(ks[1], (C, C), jnp.float32),
        "b1":  n(ks[2], (1, C), jnp.float32),
        # SAGEConv 2
        "w2l": n(ks[3], (C, C), jnp.float32),
        "w2r": n(ks[4], (C, C), jnp.float32),
        "b2":  n(ks[5], (1, C), jnp.float32),
        # linear1: C -> 128
        "wl1": n(ks[6], (C, 128), jnp.float32),
        "bl1": n(ks[7], (1, 128), jnp.float32),
        # linear2: 128 -> 32
        "wl2": n(ks[8], (128, 32), jnp.float32),
        "bl2": n(ks[9], (1, 32), jnp.float32),
        # linear3: 32 -> n_characters
        "wl3": n(ks[10], (32, n_characters), jnp.float32),
        "bl3": n(ks[11], (1, n_characters), jnp.float32),
    }


if __name__ == "__main__":
    key = jax.random.PRNGKey(0)
    k_x, k_p = jax.random.split(key)

    in_channels = 16        # sentence-embedding dimension
    n_characters = 5
    nodes_per_graph = 6
    num_graphs = 2
    N = nodes_per_graph * num_graphs

    # Node features.
    x = jax.random.normal(k_x, (N, in_channels), jnp.float32)

    # Deterministic bidirectional ring edges within each graph.
    src_list, dst_list = [], []
    for g in range(num_graphs):
        base = g * nodes_per_graph
        for i in range(nodes_per_graph):
            j = (i + 1) % nodes_per_graph
            src_list += [base + i, base + j]
            dst_list += [base + j, base + i]
    edge_index = jnp.array([src_list, dst_list], dtype=jnp.int32)  # [2, E]
    batch = jnp.repeat(jnp.arange(num_graphs, dtype=jnp.int32), nodes_per_graph)  # [N]

    params = init_params(k_p, in_channels, n_characters)

    out = persgraph_forward(x, edge_index, batch, params, num_graphs, n_characters)
    out = jax.block_until_ready(out)

    assert out.shape == (num_graphs, n_characters)
    assert bool(jnp.all(jnp.isfinite(out)))
    # log-softmax rows should (approximately) exponentiate-sum to 1.
    assert bool(jnp.allclose(jnp.sum(jnp.exp(out), axis=1), 1.0, atol=1e-3))
    print("KERNEL_OK")
</pallas_src>

<mosaic_0001>
module attributes {stable_mosaic.version = 11 : i64} {
  func.func @sage_kernel(%arg0: i32, %arg1: i32, %arg2: memref<128x128xbf16, #tpu.memory_space<vmem>>, %arg3: memref<128x128xbf16, #tpu.memory_space<vmem>>, %arg4: memref<128x128xbf16, #tpu.memory_space<vmem>>, %arg5: memref<256x128xbf16, #tpu.memory_space<vmem>>, %arg6: memref<1x128xf32, #tpu.memory_space<vmem>>, %arg7: memref<128x128xbf16, #tpu.memory_space<vmem>>, %arg8: memref<128x256xf32, #tpu.memory_space<vmem>>) attributes {dimension_semantics = [#tpu.dimension_semantics<parallel>, #tpu.dimension_semantics<arbitrary>], iteration_bounds = array<i64: 1, 1>, scalar_prefetch = 0 : i64, scratch_operands = 1 : i64, tpu.core_type = #tpu.core_type<tc>, window_params = [{transform_indices = @transform_0, window_bounds = array<i64: 128, 128>}, {transform_indices = @transform_1, window_bounds = array<i64: 128, 128>}, {transform_indices = @transform_2, window_bounds = array<i64: 128, 128>}, {pipeline_mode = #tpu.pipeline_mode<synchronous>, transform_indices = @transform_3, window_bounds = array<i64: 256, 128>}, {pipeline_mode = #tpu.pipeline_mode<synchronous>, transform_indices = @transform_4, window_bounds = array<i64: 1, 128>}, {transform_indices = @transform_5, window_bounds = array<i64: 128, 128>}]} {
    %c0_i32 = arith.constant 0 : i32
    %0 = arith.cmpi eq, %arg1, %c0_i32 : i32
    %1 = arith.extui %0 : i1 to i32
    %c0_i32_0 = arith.constant 0 : i32
    %2 = arith.cmpi ne, %1, %c0_i32_0 : i32
    scf.if %2 {
      %cst_10 = arith.constant 0.000000e+00 : f32
      %12 = vector.broadcast %cst_10 : f32 to vector<128x128xf32>
      %c0_11 = arith.constant 0 : index
      %c0_12 = arith.constant 0 : index
      %13 = vector.load %arg8[%c0_11, %c0_12] : memref<128x256xf32, #tpu.memory_space<vmem>>, vector<128x128xf32>
      tpu.vector_store %arg8[%c0_11, %c0_12], %12 {strides = array<i32>} : memref<128x256xf32, #tpu.memory_space<vmem>>, vector<128x128xf32>,
    } else {
    }
    %c0 = arith.constant 0 : index
    %c0_1 = arith.constant 0 : index
    %3 = vector.load %arg8[%c0, %c0_1] : memref<128x256xf32, #tpu.memory_space<vmem>>, vector<128x128xf32>
    %c0_2 = arith.constant 0 : index
    %c0_3 = arith.constant 0 : index
    %4 = vector.load %arg2[%c0_2, %c0_3] : memref<128x128xbf16, #tpu.memory_space<vmem>>, vector<128x128xbf16>
    %c0_4 = arith.constant 0 : index
    %c0_5 = arith.constant 0 : index
    %5 = vector.load %arg3[%c0_4, %c0_5] : memref<128x128xbf16, #tpu.memory_space<vmem>>, vector<128x128xbf16>
    %cst = arith.constant dense<0.000000e+00> : vector<128x128xf32>
    %6 = tpu.matmul %4, %5, %cst {dimension_numbers = #tpu.dot_dimension_numbers<[1], [0], [0], [1], [0, 0, 1, 1], [], []>} : vector<128x128xbf16>, vector<128x128xbf16>, vector<128x128xf32> -> vector<128x128xf32>
    %7 = arith.addf %3, %6 : vector<128x128xf32>
    %c0_6 = arith.constant 0 : index
    %c0_7 = arith.constant 0 : index
    %8 = vector.load %arg8[%c0_6, %c0_7] : memref<128x256xf32, #tpu.memory_space<vmem>>, vector<128x128xf32>
    tpu.vector_store %arg8[%c0_6, %c0_7], %7 {strides = array<i32>} : memref<128x256xf32, #tpu.memory_space<vmem>>, vector<128x128xf32>,
    %c0_i32_8 = arith.constant 0 : i32
    %9 = arith.cmpi eq, %arg1, %c0_i32_8 : i32
    %10 = arith.extui %9 : i1 to i32
    %c0_i32_9 = arith.constant 0 : i32
    %11 = arith.cmpi ne, %10, %c0_i32_9 : i32
    scf.if %11 {
      %c0_10 = arith.constant 0 : index
      %c0_11 = arith.constant 0 : index
      %12 = vector.load %arg4[%c0_10, %c0_11] : memref<128x128xbf16, #tpu.memory_space<vmem>>, vector<128x128xbf16>
      %13 = arith.extf %12 : vector<128x128xbf16> to vector<128x128xf32>
      %c0_12 = arith.constant 0 : index
      %c128 = arith.constant 128 : index
      %14 = vector.load %arg8[%c0_12, %c128] : memref<128x256xf32, #tpu.memory_space<vmem>>, vector<128x128xf32>
      tpu.vector_store %arg8[%c0_12, %c128], %13 {strides = array<i32>} : memref<128x256xf32, #tpu.memory_space<vmem>>, vector<128x128xf32>,
      %c0_13 = arith.constant 0 : index
      %c0_14 = arith.constant 0 : index
      %15 = vector.load %arg8[%c0_13, %c0_14] : memref<128x256xf32, #tpu.memory_space<vmem>>, vector<128x256xf32>
      %16 = arith.truncf %15 : vector<128x256xf32> to vector<128x256xbf16>
      %c0_15 = arith.constant 0 : index
      %c0_16 = arith.constant 0 : index
      %17 = vector.load %arg5[%c0_15, %c0_16] : memref<256x128xbf16, #tpu.memory_space<vmem>>, vector<256x128xbf16>
      %cst_17 = arith.constant dense<0.000000e+00> : vector<128x128xf32>
      %18 = tpu.matmul %16, %17, %cst_17 {dimension_numbers = #tpu.dot_dimension_numbers<[1], [0], [0], [1], [0, 0, 1, 1], [], []>} : vector<128x256xbf16>, vector<256x128xbf16>, vector<128x128xf32> -> vector<128x128xf32>
      %c0_18 = arith.constant 0 : index
      %c0_19 = arith.constant 0 : index
      %19 = vector.load %arg6[%c0_18, %c0_19] : memref<1x128xf32, #tpu.memory_space<vmem>>, vector<1x128xf32>
      %20 = vector.broadcast %19 : vector<1x128xf32> to vector<128x128xf32>
      %21 = arith.addf %18, %20 : vector<128x128xf32>
      %cst_20 = arith.constant 0.000000e+00 : f32
      %22 = vector.broadcast %cst_20 : f32 to vector<128x128xf32>
      %23 = arith.maximumf %21, %22 : vector<128x128xf32>
      %24 = arith.truncf %23 : vector<128x128xf32> to vector<128x128xbf16>
      %c0_21 = arith.constant 0 : index
      %c0_22 = arith.constant 0 : index
      %25 = vector.load %arg7[%c0_21, %c0_22] : memref<128x128xbf16, #tpu.memory_space<vmem>>, vector<128x128xbf16>
      tpu.vector_store %arg7[%c0_21, %c0_22], %24 {strides = array<i32>} : memref<128x128xbf16, #tpu.memory_space<vmem>>, vector<128x128xbf16>,
    } else {
    }
    return
  }
  func.func @transform_0(%arg0: i32, %arg1: i32) -> (i32, i32) {
    %c0_i32 = arith.constant 0 : i32
    return %arg0, %arg1 : i32, i32
  }
  func.func @transform_1(%arg0: i32, %arg1: i32) -> (i32, i32) {
    %c0_i32 = arith.constant 0 : i32
    %c0_i32_0 = arith.constant 0 : i32
    return %arg1, %c0_i32 : i32, i32
  }
  func.func @transform_2(%arg0: i32, %arg1: i32) -> (i32, i32) {
    %c0_i32 = arith.constant 0 : i32
    %c0_i32_0 = arith.constant 0 : i32
    return %arg0, %c0_i32 : i32, i32
  }
  func.func @transform_3(%arg0: i32, %arg1: i32) -> (i32, i32) {
    %c0_i32 = arith.constant 0 : i32
    %c0_i32_0 = arith.constant 0 : i32
    %c0_i32_1 = arith.constant 0 : i32
    return %c0_i32, %c0_i32_0 : i32, i32
  }
  func.func @transform_4(%arg0: i32, %arg1: i32) -> (i32, i32) {
    %c0_i32 = arith.constant 0 : i32
    %c0_i32_0 = arith.constant 0 : i32
    %c0_i32_1 = arith.constant 0 : i32
    return %c0_i32, %c0_i32_0 : i32, i32
  }
  func.func @transform_5(%arg0: i32, %arg1: i32) -> (i32, i32) {
    %c0_i32 = arith.constant 0 : i32
    %c0_i32_0 = arith.constant 0 : i32
    return %arg0, %c0_i32 : i32, i32
  }
}

</mosaic_0001>

<llo_original>
// kernel: tpu_custom_call.1
$region0: #{tpu_custom_call.1}
  #allocation0 [shape = 'u32[]', space=smem, size = 0x4, offset = 0x4, fixed_abs, tag = 'smem constant byte address 0x4 - core index']
  #allocation1 [shape = 'u32[144,128]{1,0:T(1,128)}', space=vmem, size = 0x12000, scoped, tag = 'internal scratch']
  #allocation2 [shape = 'f32[128,256]{1,0:T(8,128)}', space=vmem, size = 0x20000, scoped, tag = 'scratch operand']
  %s0 = inlined_call_operand.hbm [shape: bf16[128,128], index: 0, kind: input, shape index: {}]
  %s1 = inlined_call_operand.hbm [shape: bf16[128,128], index: 1, kind: input, shape index: {}]
  %s2 = inlined_call_operand.hbm [shape: bf16[128,128], index: 2, kind: input, shape index: {}]
  %s3 = inlined_call_operand.hbm [shape: bf16[256,128], index: 3, kind: input, shape index: {}]
  %s4 = inlined_call_operand.vmem [shape: f32[1,128], index: 4, kind: input, shape index: {}]
  %s5 = inlined_call_operand.hbm [shape: bf16[128,128], index: 5, kind: output, shape index: {}]
  %s6 = sld [smem:[#allocation0]]
  $region54: #{tpu_custom_call.1} parent=0
    _
  %s8 = ssub.s32 1, %s6
  %s9 = scalar_select 0, %s8, %s6
  $region1: #{tpu_custom_call.1} parent=0
    #allocation3 [shape = 'u8[32768]{0}', space=vmem, size = 0x8000, scoped, tag = 'input window, operand 0, single buffered']
    #allocation4 [shape = 's32[1]{0}', space=sflag, size = 0x4, scoped, tag = 'scoped memory for tpu_custom_call.1']
    #allocation5 [shape = 's32[1]{0}', space=sflag, size = 0x4, scoped, tag = 'scoped memory for tpu_custom_call.1']
    #allocation6 [shape = 'u8[32768]{0}', space=vmem, size = 0x8000, scoped, tag = 'input window, operand 1, single buffered']
    #allocation7 [shape = 's32[1]{0}', space=sflag, size = 0x4, scoped, tag = 'scoped memory for tpu_custom_call.1']
    #allocation8 [shape = 'u8[32768]{0}', space=vmem, size = 0x8000, scoped, tag = 'input window, operand 2, single buffered']
    #allocation9 [shape = 'u8[65536]{0}', space=vmem, size = 0x10000, scoped, tag = 'input window, operand 3, single buffered']
    #allocation10 [shape = 's32[1]{0}', space=sflag, size = 0x4, scoped, tag = 'scoped memory for tpu_custom_call.1']
    #allocation11 [shape = 'u8[32768]{0}', space=vmem, size = 0x8000, scoped, tag = 'output window, operand 0, single buffered']
    %10 = vsyncpa [#allocation4], 0
    %11 = vsyncpa [#allocation7], 0
    %12 = vsyncpa [#allocation10], 0
    %13 = vsyncpa [#allocation5], 0
    // Predicated region
    $region2: #{tpu_custom_call.1} parent=1 // pred_check
      _
    $region3: #{tpu_custom_call.1} parent=1 // pred_check_branch
      %15 = sbr.rel (0) target = $region5
    $region4: #{tpu_custom_call.1} parent=1 // pred_region
      %s17 = ssub.s32 1024, 1024
      %18 = vsyncadd [#allocation4], %s17
      %s19 = sshll.u32 [#allocation3], 4
      %s20 = int_to_ptr.vmem [resolvable:$true] %s19
      %25 = dma.hbm_to_vmem [thread:$0]  %s0, 1024, %s20, [#allocation4], 64, 64, 4
    $region5: #{tpu_custom_call.1} parent=1 // pred_fallthru
      _
    // Predicated region
    $region6: #{tpu_custom_call.1} parent=1 // pred_check
      _
    $region7: #{tpu_custom_call.1} parent=1 // pred_check_branch
      %27 = sbr.rel (0) target = $region9
    $region8: #{tpu_custom_call.1} parent=1 // pred_region
      %s29 = ssub.s32 1024, 1024
      %30 = vsyncadd [#allocation7], %s29
      %s31 = sshll.u32 [#allocation6], 4
      %s32 = int_to_ptr.vmem [resolvable:$true] %s31
      %37 = dma.hbm_to_vmem [thread:$0]  %s1, 1024, %s32, [#allocation7], 64, 64, 4
    $region9: #{tpu_custom_call.1} parent=1 // pred_fallthru
      _
    // Predicated region
    $region10: #{tpu_custom_call.1} parent=1 // pred_check
      _
    $region11: #{tpu_custom_call.1} parent=1 // pred_check_branch
      %39 = sbr.rel (0) target = $region13
    $region12: #{tpu_custom_call.1} parent=1 // pred_region
      %s41 = ssub.s32 1024, 1024
      %42 = vsyncadd [#allocation7], %s41
      %s43 = sshll.u32 [#allocation8], 4
      %s44 = int_to_ptr.vmem [resolvable:$true] %s43
      %49 = dma.hbm_to_vmem [thread:$0]  %s2, 1024, %s44, [#allocation7], 64, 64, 4
    $region13: #{tpu_custom_call.1} parent=1 // pred_fallthru
      _
    // Predicated region
    $region14: #{tpu_custom_call.1} parent=1 // pred_check
      _
    $region15: #{tpu_custom_call.1} parent=1 // pred_check_branch
      %51 = sbr.rel (0) target = $region17
    $region16: #{tpu_custom_call.1} parent=1 // pred_region
      %s53 = ssub.s32 2048, 2048
      %54 = vsyncadd [#allocation10], %s53
      %s55 = sshll.u32 [#allocation9], 4
      %s56 = int_to_ptr.vmem [resolvable:$true] %s55
      %61 = dma.hbm_to_vmem [thread:$0]  %s3, 2048, %s56, [#allocation10], 64, 64, 4
    $region17: #{tpu_custom_call.1} parent=1 // pred_fallthru
      _
    // Predicated region
    $region18: #{tpu_custom_call.1} parent=1 // pred_check
      _
    $region19: #{tpu_custom_call.1} parent=1 // pred_check_branch
      %63 = sbr.rel (0) target = $region21
    $region20: #{tpu_custom_call.1} parent=1 // pred_region
      _
    $region21: #{tpu_custom_call.1} parent=1 // pred_fallthru
      _
    // Predicated region
    $region22: #{tpu_custom_call.1} parent=1 // pred_check
      _
    $region23: #{tpu_custom_call.1} parent=1 // pred_check_branch
      %65 = sbr.rel (0) target = $region25
    $region24: #{tpu_custom_call.1} parent=1 // pred_region
      %66 = dma.done [#allocation4], 1024
    $region25: #{tpu_custom_call.1} parent=1 // pred_fallthru
      _
    // Predicated region
    $region26: #{tpu_custom_call.1} parent=1 // pred_check
      _
    $region27: #{tpu_custom_call.1} parent=1 // pred_check_branch
      %68 = sbr.rel (0) target = $region29
    $region28: #{tpu_custom_call.1} parent=1 // pred_region
      %69 = dma.done [#allocation7], 1024
    $region29: #{tpu_custom_call.1} parent=1 // pred_fallthru
      _
    // Predicated region
    $region30: #{tpu_custom_call.1} parent=1 // pred_check
      _
    $region31: #{tpu_custom_call.1} parent=1 // pred_check_branch
      %71 = sbr.rel (0) target = $region33
    $region32: #{tpu_custom_call.1} parent=1 // pred_region
      %72 = dma.done [#allocation7], 1024
    $region33: #{tpu_custom_call.1} parent=1 // pred_fallthru
      _
    // Predicated region
    $region34: #{tpu_custom_call.1} parent=1 // pred_check
      _
    $region35: #{tpu_custom_call.1} parent=1 // pred_check_branch
      %74 = sbr.rel (0) target = $region37
    $region36: #{tpu_custom_call.1} parent=1 // pred_region
      %75 = dma.done [#allocation10], 2048
    $region37: #{tpu_custom_call.1} parent=1 // pred_fallthru
      _
    %p77 = scmp.eq.s32.totalorder 0, 0
    // Predicated region
    $region38: #{tpu_custom_call.1} parent=1 // pred_check
      %p78 = pneg %p77
    $region39: #{tpu_custom_call.1} parent=1 // pred_check_branch
      %80 = sbr.rel (%p78) target = $region41
    $region40: #{tpu_custom_call.1} parent=1 // pred_region
      %81 = vst [vmem:[#allocation2] sm:$0xff] 0.0
      %82 = vst [vmem:[#allocation2 + $0x10] sm:$0xff] 0.0
      %83 = vst [vmem:[#allocation2 + $0x20] sm:$0xff] 0.0
      %84 = vst [vmem:[#allocation2 + $0x30] sm:$0xff] 0.0
      %85 = vst [vmem:[#allocation2 + $0x40] sm:$0xff] 0.0
      %86 = vst [vmem:[#allocation2 + $0x50] sm:$0xff] 0.0
      %87 = vst [vmem:[#allocation2 + $0x60] sm:$0xff] 0.0
      %88 = vst [vmem:[#allocation2 + $0x70] sm:$0xff] 0.0
      %89 = vst [vmem:[#allocation2 + $0x80] sm:$0xff] 0.0
      %90 = vst [vmem:[#allocation2 + $0x90] sm:$0xff] 0.0
      %91 = vst [vmem:[#allocation2 + $0xa0] sm:$0xff] 0.0
      %92 = vst [vmem:[#allocation2 + $0xb0] sm:$0xff] 0.0
      %93 = vst [vmem:[#allocation2 + $0xc0] sm:$0xff] 0.0
      %94 = vst [vmem:[#allocation2 + $0xd0] sm:$0xff] 0.0
      %95 = vst [vmem:[#allocation2 + $0xe0] sm:$0xff] 0.0
      %96 = vst [vmem:[#allocation2 + $0xf0] sm:$0xff] 0.0
    $region41: #{tpu_custom_call.1} parent=1 // pred_fallthru
      _
    %v97 = vld [vmem:[#allocation2] sm:$0xff]
    %v98 = vld [vmem:[#allocation2 + $0x10] sm:$0xff]
    %v99 = vld [vmem:[#allocation2 + $0x20] sm:$0xff]
    %v100 = vld [vmem:[#allocation2 + $0x30] sm:$0xff]
    %v101 = vld [vmem:[#allocation2 + $0x40] sm:$0xff]
    %v102 = vld [vmem:[#allocation2 + $0x50] sm:$0xff]
    %v103 = vld [vmem:[#allocation2 + $0x60] sm:$0xff]
    %v104 = vld [vmem:[#allocation2 + $0x70] sm:$0xff]
    %v105 = vld [vmem:[#allocation2 + $0x80] sm:$0xff]
    %v106 = vld [vmem:[#allocation2 + $0x90] sm:$0xff]
    %v107 = vld [vmem:[#allocation2 + $0xa0] sm:$0xff]
    %v108 = vld [vmem:[#allocation2 + $0xb0] sm:$0xff]
    %v109 = vld [vmem:[#allocation2 + $0xc0] sm:$0xff]
    %v110 = vld [vmem:[#allocation2 + $0xd0] sm:$0xff]
    %v111 = vld [vmem:[#allocation2 + $0xe0] sm:$0xff]
    %v112 = vld [vmem:[#allocation2 + $0xf0] sm:$0xff]
    %v113 = vld [vmem:[#allocation3] sm:$0xf]
    %v114 = vld [vmem:[#allocation3 + $0x4] sm:$0xf]
    %v115 = vld [vmem:[#allocation3 + $0x8] sm:$0xf]
    %v116 = vld [vmem:[#allocation3 + $0xc] sm:$0xf]
    %v117 = vld [vmem:[#allocation3 + $0x10] sm:$0xf]
    %v118 = vld [vmem:[#allocation3 + $0x14] sm:$0xf]
    %v119 = vld [vmem:[#allocation3 + $0x18] sm:$0xf]
    %v120 = vld [vmem:[#allocation3 + $0x1c] sm:$0xf]
    %v121 = vld [vmem:[#allocation3 + $0x20] sm:$0xf]
    %v122 = vld [vmem:[#allocation3 + $0x24] sm:$0xf]
    %v123 = vld [vmem:[#allocation3 + $0x28] sm:$0xf]
    %v124 = vld [vmem:[#allocation3 + $0x2c] sm:$0xf]
    %v125 = vld [vmem:[#allocation3 + $0x30] sm:$0xf]
    %v126 = vld [vmem:[#allocation3 + $0x34] sm:$0xf]
    %v127 = vld [vmem:[#allocation3 + $0x38] sm:$0xf]
    %v128 = vld [vmem:[#allocation3 + $0x3c] sm:$0xf]
    %v129 = vld [vmem:[#allocation6] sm:$0xf]
    %v130 = vld [vmem:[#allocation6 + $0x4] sm:$0xf]
    %v131 = vld [vmem:[#allocation6 + $0x8] sm:$0xf]
    %v132 = vld [vmem:[#allocation6 + $0xc] sm:$0xf]
    %v133 = vld [vmem:[#allocation6 + $0x10] sm:$0xf]
    %v134 = vld [vmem:[#allocation6 + $0x14] sm:$0xf]
    %v135 = vld [vmem:[#allocation6 + $0x18] sm:$0xf]
    %v136 = vld [vmem:[#allocation6 + $0x1c] sm:$0xf]
    %v137 = vld [vmem:[#allocation6 + $0x20] sm:$0xf]
    %v138 = vld [vmem:[#allocation6 + $0x24] sm:$0xf]
    %v139 = vld [vmem:[#allocation6 + $0x28] sm:$0xf]
    %v140 = vld [vmem:[#allocation6 + $0x2c] sm:$0xf]
    %v141 = vld [vmem:[#allocation6 + $0x30] sm:$0xf]
    %v142 = vld [vmem:[#allocation6 + $0x34] sm:$0xf]
    %v143 = vld [vmem:[#allocation6 + $0x38] sm:$0xf]
    %v144 = vld [vmem:[#allocation6 + $0x3c] sm:$0xf]
    %v161 = vunpack.c.l.b16 %v113
    %v162 = vunpack.c.l.b16 %v114
    %v163 = vunpack.c.l.b16 %v115
    %v164 = vunpack.c.l.b16 %v116
    %v165 = vunpack.c.l.b16 %v117
    %v166 = vunpack.c.l.b16 %v118
    %v167 = vunpack.c.l.b16 %v119
    %v168 = vunpack.c.l.b16 %v120
    %v169 = vunpack.c.l.b16 %v121
    %v170 = vunpack.c.l.b16 %v122
    %v171 = vunpack.c.l.b16 %v123
    %v172 = vunpack.c.l.b16 %v124
    %v173 = vunpack.c.l.b16 %v125
    %v174 = vunpack.c.l.b16 %v126
    %v175 = vunpack.c.l.b16 %v127
    %v176 = vunpack.c.l.b16 %v128
    %v177 = vpack.c.b16 %v162, %v161
    %v178 = vpack.c.b16 %v164, %v163
    %v179 = vpack.c.b16 %v166, %v165
    %v180 = vpack.c.b16 %v168, %v167
    %v181 = vpack.c.b16 %v170, %v169
    %v182 = vpack.c.b16 %v172, %v171
    %v183 = vpack.c.b16 %v174, %v173
    %v184 = vpack.c.b16 %v176, %v175
    %v209 = vunpack.c.l.b16 %v129
    %v210 = vunpack.c.l.b16 %v130
    %v211 = vunpack.c.l.b16 %v131
    %v212 = vunpack.c.l.b16 %v132
    %v213 = vunpack.c.l.b16 %v133
    %v214 = vunpack.c.l.b16 %v134
    %v215 = vunpack.c.l.b16 %v135
    %v216 = vunpack.c.l.b16 %v136
    %v217 = vunpack.c.l.b16 %v137
    %v218 = vunpack.c.l.b16 %v138
    %v219 = vunpack.c.l.b16 %v139
    %v220 = vunpack.c.l.b16 %v140
    %v221 = vunpack.c.l.b16 %v141
    %v222 = vunpack.c.l.b16 %v142
    %v223 = vunpack.c.l.b16 %v143
    %v224 = vunpack.c.l.b16 %v144
    %v225 = vpack.c.b16 %v210, %v209
    %v226 = vpack.c.b16 %v212, %v211
    %v227 = vpack.c.b16 %v214, %v213
    %v228 = vpack.c.b16 %v216, %v215
    %v229 = vpack.c.b16 %v218, %v217
    %v230 = vpack.c.b16 %v220, %v219
    %v231 = vpack.c.b16 %v222, %v221
    %v232 = vpack.c.b16 %v224, %v223
    %241 = vmatprep.subr.bf16.mxu0 0
    %242 = vmatpush1.bf16.msra.mxu0 %v225
    %243 = vmatprep.subr.bf16.mxu0 0
    %244 = vmatpush1.bf16.msra.mxu0 %v226
    %245 = vmatprep.subr.bf16.mxu0 0
    %246 = vmatpush1.bf16.msra.mxu0 %v227
    %247 = vmatprep.subr.bf16.mxu0 0
    %248 = vmatpush1.bf16.msra.mxu0 %v228
    %249 = vmatprep.subr.bf16.mxu0 0
    %250 = vmatpush1.bf16.msra.mxu0 %v229
    %251 = vmatprep.subr.bf16.mxu0 0
    %252 = vmatpush1.bf16.msra.mxu0 %v230
    %253 = vmatprep.subr.bf16.mxu0 0
    %254 = vmatpush1.bf16.msra.mxu0 %v231
    %255 = vmatprep.subr.bf16.mxu0 0
    %256 = vmatpush1.bf16.msra.mxu0 %v232
    %257 = vmatprep.subr.bf16.mxu0 0
    %258 = vmatpush1.bf16.msra.mxu0 0
    %259 = vmatprep.subr.bf16.mxu0 0
    %260 = vmatpush1.bf16.msra.mxu0 0
    %261 = vmatprep.subr.bf16.mxu0 0
    %262 = vmatpush1.bf16.msra.mxu0 0
    %263 = vmatprep.subr.bf16.mxu0 0
    %264 = vmatpush1.bf16.msra.mxu0 0
    %265 = vmatprep.subr.bf16.mxu0 0
    %266 = vmatpush1.bf16.msra.mxu0 0
    %267 = vmatprep.subr.bf16.mxu0 0
    %268 = vmatpush1.bf16.msra.mxu0 0
    %269 = vmatprep.subr.bf16.mxu0 0
    %270 = vmatpush1.bf16.msra.mxu0 0
    %271 = vmatprep.subr.bf16.mxu0 0
    %272 = vmatpush1.bf16.msra.mxu0 0
    %273 = vmatprep.mubr.bf16.mxu0 0
    %274 = vmatmul.mubr.bf16.gmra.mrb[0].mxu0 %v177
    %v275 = vpop.f32.mrb[0].mxu0
    %v276 = vadd.f32 0.0, %v275
    %v277 = vpop.f32.mrb[0].mxu0
    %v278 = vpop.f32.mrb[0].mxu0
    %v279 = vadd.f32 0.0, %v278
    %v280 = vpop.f32.mrb[0].mxu0
    %281 = vmatprep.mubr.bf16.mxu0 0
    %282 = vmatmul.mubr.bf16.gmra.mrb[0].mxu0 %v178
    %v283 = vpop.f32.mrb[0].mxu0
    %v284 = vadd.f32 0.0, %v283
    %v285 = vpop.f32.mrb[0].mxu0
    %v286 = vpop.f32.mrb[0].mxu0
    %v287 = vadd.f32 0.0, %v286
    %v288 = vpop.f32.mrb[0].mxu0
    %289 = vmatprep.mubr.bf16.mxu0 0
    %290 = vmatmul.mubr.bf16.gmra.mrb[0].mxu0 %v179
    %v291 = vpop.f32.mrb[0].mxu0
    %v292 = vadd.f32 0.0, %v291
    %v293 = vpop.f32.mrb[0].mxu0
    %v294 = vpop.f32.mrb[0].mxu0
    %v295 = vadd.f32 0.0, %v294
    %v296 = vpop.f32.mrb[0].mxu0
    %297 = vmatprep.mubr.bf16.mxu0 0
    %298 = vmatmul.mubr.bf16.gmra.mrb[0].mxu0 %v180
    %v299 = vpop.f32.mrb[0].mxu0
    %v300 = vadd.f32 0.0, %v299
    %v301 = vpop.f32.mrb[0].mxu0
    %v302 = vpop.f32.mrb[0].mxu0
    %v303 = vadd.f32 0.0, %v302
    %v304 = vpop.f32.mrb[0].mxu0
    %305 = vmatprep.mubr.bf16.mxu0 0
    %306 = vmatmul.mubr.bf16.gmra.mrb[0].mxu0 %v181
    %v307 = vpop.f32.mrb[0].mxu0
    %v308 = vadd.f32 0.0, %v307
    %v309 = vpop.f32.mrb[0].mxu0
    %v310 = vpop.f32.mrb[0].mxu0
    %v311 = vadd.f32 0.0, %v310
    %v312 = vpop.f32.mrb[0].mxu0
    %313 = vmatprep.mubr.bf16.mxu0 0
    %314 = vmatmul.mubr.bf16.gmra.mrb[0].mxu0 %v182
    %v315 = vpop.f32.mrb[0].mxu0
    %v316 = vadd.f32 0.0, %v315
    %v317 = vpop.f32.mrb[0].mxu0
    %v318 = vpop.f32.mrb[0].mxu0
    %v319 = vadd.f32 0.0, %v318
    %v320 = vpop.f32.mrb[0].mxu0
    %321 = vmatprep.mubr.bf16.mxu0 0
    %322 = vmatmul.mubr.bf16.gmra.mrb[0].mxu0 %v183
    %v323 = vpop.f32.mrb[0].mxu0
    %v324 = vadd.f32 0.0, %v323
    %v325 = vpop.f32.mrb[0].mxu0
    %v326 = vpop.f32.mrb[0].mxu0
    %v327 = vadd.f32 0.0, %v326
    %v328 = vpop.f32.mrb[0].mxu0
    %329 = vmatprep.mubr.bf16.mxu0 0
    %330 = vmatmul.mubr.bf16.gmra.mrb[0].mxu0 %v184
    %v331 = vpop.f32.mrb[0].mxu0
    %v332 = vadd.f32 0.0, %v331
    %v333 = vpop.f32.mrb[0].mxu0
    %v334 = vpop.f32.mrb[0].mxu0
    %v335 = vadd.f32 0.0, %v334
    %v336 = vpop.f32.mrb[0].mxu0
    %337 = vdwg.mxu0
    %v338 = vadd.f32 %v97, %v276
    %v339 = vadd.f32 %v98, %v279
    %v340 = vadd.f32 %v99, %v284
    %v341 = vadd.f32 %v100, %v287
    %v342 = vadd.f32 %v101, %v292
    %v343 = vadd.f32 %v102, %v295
    %v344 = vadd.f32 %v103, %v300
    %v345 = vadd.f32 %v104, %v303
    %v346 = vadd.f32 %v105, %v308
    %v347 = vadd.f32 %v106, %v311
    %v348 = vadd.f32 %v107, %v316
    %v349 = vadd.f32 %v108, %v319
    %v350 = vadd.f32 %v109, %v324
    %v351 = vadd.f32 %v110, %v327
    %v352 = vadd.f32 %v111, %v332
    %v353 = vadd.f32 %v112, %v335
    %354 = vst [vmem:[#allocation2] sm:$0xff] %v338
    %355 = vst [vmem:[#allocation2 + $0x10] sm:$0xff] %v339
    %356 = vst [vmem:[#allocation2 + $0x20] sm:$0xff] %v340
    %357 = vst [vmem:[#allocation2 + $0x30] sm:$0xff] %v341
    %358 = vst [vmem:[#allocation2 + $0x40] sm:$0xff] %v342
    %359 = vst [vmem:[#allocation2 + $0x50] sm:$0xff] %v343
    %360 = vst [vmem:[#allocation2 + $0x60] sm:$0xff] %v344
    %361 = vst [vmem:[#allocation2 + $0x70] sm:$0xff] %v345
    %362 = vst [vmem:[#allocation2 + $0x80] sm:$0xff] %v346
    %363 = vst [vmem:[#allocation2 + $0x90] sm:$0xff] %v347
    %364 = vst [vmem:[#allocation2 + $0xa0] sm:$0xff] %v348
    %365 = vst [vmem:[#allocation2 + $0xb0] sm:$0xff] %v349
    %366 = vst [vmem:[#allocation2 + $0xc0] sm:$0xff] %v350
    %367 = vst [vmem:[#allocation2 + $0xd0] sm:$0xff] %v351
    %368 = vst [vmem:[#allocation2 + $0xe0] sm:$0xff] %v352
    %369 = vst [vmem:[#allocation2 + $0xf0] sm:$0xff] %v353
    // Predicated region
    $region42: #{tpu_custom_call.1} parent=1 // pred_check
      %p370 = pneg %p77
    $region43: #{tpu_custom_call.1} parent=1 // pred_check_branch
      %372 = sbr.rel (%p370) target = $region45
    $region44: #{tpu_custom_call.1} parent=1 // pred_region
      %v373 = vld [vmem:[#allocation8] sm:$0xf]
      %v374 = vld [vmem:[#allocation8 + $0x4] sm:$0xf]
      %v375 = vld [vmem:[#allocation8 + $0x8] sm:$0xf]
      %v376 = vld [vmem:[#allocation8 + $0xc] sm:$0xf]
      %v377 = vld [vmem:[#allocation8 + $0x10] sm:$0xf]
      %v378 = vld [vmem:[#allocation8 + $0x14] sm:$0xf]
      %v379 = vld [vmem:[#allocation8 + $0x18] sm:$0xf]
      %v380 = vld [vmem:[#allocation8 + $0x1c] sm:$0xf]
      %v381 = vld [vmem:[#allocation8 + $0x20] sm:$0xf]
      %v382 = vld [vmem:[#allocation8 + $0x24] sm:$0xf]
      %v383 = vld [vmem:[#allocation8 + $0x28] sm:$0xf]
      %v384 = vld [vmem:[#allocation8 + $0x2c] sm:$0xf]
      %v385 = vld [vmem:[#allocation8 + $0x30] sm:$0xf]
      %v386 = vld [vmem:[#allocation8 + $0x34] sm:$0xf]
      %v387 = vld [vmem:[#allocation8 + $0x38] sm:$0xf]
      %v388 = vld [vmem:[#allocation8 + $0x3c] sm:$0xf]
      %v389 = vunpack.c.l.bf16 %v373
      %v390 = vunpack.c.l.bf16 %v374
      %v391 = vunpack.c.l.bf16 %v375
      %v392 = vunpack.c.l.bf16 %v376
      %v393 = vunpack.c.l.bf16 %v377
      %v394 = vunpack.c.l.bf16 %v378
      %v395 = vunpack.c.l.bf16 %v379
      %v396 = vunpack.c.l.bf16 %v380
      %v397 = vunpack.c.l.bf16 %v381
      %v398 = vunpack.c.l.bf16 %v382
      %v399 = vunpack.c.l.bf16 %v383
      %v400 = vunpack.c.l.bf16 %v384
      %v401 = vunpack.c.l.bf16 %v385
      %v402 = vunpack.c.l.bf16 %v386
      %v403 = vunpack.c.l.bf16 %v387
      %v404 = vunpack.c.l.bf16 %v388
      %405 = vst [vmem:[#allocation2 + $0x8] sm:$0xff] %v389
      %406 = vst [vmem:[#allocation2 + $0x18] sm:$0xff] %v390
      %407 = vst [vmem:[#allocation2 + $0x28] sm:$0xff] %v391
      %408 = vst [vmem:[#allocation2 + $0x38] sm:$0xff] %v392
      %409 = vst [vmem:[#allocation2 + $0x48] sm:$0xff] %v393
      %410 = vst [vmem:[#allocation2 + $0x58] sm:$0xff] %v394
      %411 = vst [vmem:[#allocation2 + $0x68] sm:$0xff] %v395
      %412 = vst [vmem:[#allocation2 + $0x78] sm:$0xff] %v396
      %413 = vst [vmem:[#allocation2 + $0x88] sm:$0xff] %v397
      %414 = vst [vmem:[#allocation2 + $0x98] sm:$0xff] %v398
      %415 = vst [vmem:[#allocation2 + $0xa8] sm:$0xff] %v399
      %416 = vst [vmem:[#allocation2 + $0xb8] sm:$0xff] %v400
      %417 = vst [vmem:[#allocation2 + $0xc8] sm:$0xff] %v401
      %418 = vst [vmem:[#allocation2 + $0xd8] sm:$0xff] %v402
      %419 = vst [vmem:[#allocation2 + $0xe8] sm:$0xff] %v403
      %420 = vst [vmem:[#allocation2 + $0xf8] sm:$0xff] %v404
      %v421 = vld [vmem:[#allocation2] sm:$0xff]
      %v422 = vld [vmem:[#allocation2 + $0x8] sm:$0xff]
      %v423 = vld [vmem:[#allocation2 + $0x10] sm:$0xff]
      %v424 = vld [vmem:[#allocation2 + $0x18] sm:$0xff]
      %v425 = vld [vmem:[#allocation2 + $0x20] sm:$0xff]
      %v426 = vld [vmem:[#allocation2 + $0x28] sm:$0xff]
      %v427 = vld [vmem:[#allocation2 + $0x30] sm:$0xff]
      %v428 = vld [vmem:[#allocation2 + $0x38] sm:$0xff]
      %v429 = vld [vmem:[#allocation2 + $0x40] sm:$0xff]
      %v430 = vld [vmem:[#allocation2 + $0x48] sm:$0xff]
      %v431 = vld [vmem:[#allocation2 + $0x50] sm:$0xff]
      %v432 = vld [vmem:[#allocation2 + $0x58] sm:$0xff]
      %v433 = vld [vmem:[#allocation2 + $0x60] sm:$0xff]
      %v434 = vld [vmem:[#allocation2 + $0x68] sm:$0xff]
      %v435 = vld [vmem:[#allocation2 + $0x70] sm:$0xff]
      %v436 = vld [vmem:[#allocation2 + $0x78] sm:$0xff]
      %v437 = vld [vmem:[#allocation2 + $0x80] sm:$0xff]
      %v438 = vld [vmem:[#allocation2 + $0x88] sm:$0xff]
      %v439 = vld [vmem:[#allocation2 + $0x90] sm:$0xff]
      %v440 = vld [vmem:[#allocation2 + $0x98] sm:$0xff]
      %v441 = vld [vmem:[#allocation2 + $0xa0] sm:$0xff]
      %v442 = vld [vmem:[#allocation2 + $0xa8] sm:$0xff]
      %v443 = vld [vmem:[#allocation2 + $0xb0] sm:$0xff]
      %v444 = vld [vmem:[#allocation2 + $0xb8] sm:$0xff]
      %v445 = vld [vmem:[#allocation2 + $0xc0] sm:$0xff]
      %v446 = vld [vmem:[#allocation2 + $0xc8] sm:$0xff]
      %v447 = vld [vmem:[#allocation2 + $0xd0] sm:$0xff]
      %v448 = vld [vmem:[#allocation2 + $0xd8] sm:$0xff]
      %v449 = vld [vmem:[#allocation2 + $0xe0] sm:$0xff]
      %v450 = vld [vmem:[#allocation2 + $0xe8] sm:$0xff]
      %v451 = vld [vmem:[#allocation2 + $0xf0] sm:$0xff]
      %v452 = vld [vmem:[#allocation2 + $0xf8] sm:$0xff]
      %v453 = vpack.c.bf16 %v423, %v421
      %v454 = vpack.c.bf16 %v424, %v422
      %v455 = vpack.c.bf16 %v427, %v425
      %v456 = vpack.c.bf16 %v428, %v426
      %v457 = vpack.c.bf16 %v431, %v429
      %v458 = vpack.c.bf16 %v432, %v430
      %v459 = vpack.c.bf16 %v435, %v433
      %v460 = vpack.c.bf16 %v436, %v434
      %v461 = vpack.c.bf16 %v439, %v437
      %v462 = vpack.c.bf16 %v440, %v438
      %v463 = vpack.c.bf16 %v443, %v441
      %v464 = vpack.c.bf16 %v444, %v442
      %v465 = vpack.c.bf16 %v447, %v445
      %v466 = vpack.c.bf16 %v448, %v446
      %v467 = vpack.c.bf16 %v451, %v449
      %v468 = vpack.c.bf16 %v452, %v450
      %v469 = vld [vmem:[#allocation9] sm:$0xf]
      %v470 = vld [vmem:[#allocation9 + $0x4] sm:$0xf]
      %v471 = vld [vmem:[#allocation9 + $0x8] sm:$0xf]
      %v472 = vld [vmem:[#allocation9 + $0xc] sm:$0xf]
      %v473 = vld [vmem:[#allocation9 + $0x10] sm:$0xf]
      %v474 = vld [vmem:[#allocation9 + $0x14] sm:$0xf]
      %v475 = vld [vmem:[#allocation9 + $0x18] sm:$0xf]
      %v476 = vld [vmem:[#allocation9 + $0x1c] sm:$0xf]
      %v477 = vld [vmem:[#allocation9 + $0x20] sm:$0xf]
      %v478 = vld [vmem:[#allocation9 + $0x24] sm:$0xf]
      %v479 = vld [vmem:[#allocation9 + $0x28] sm:$0xf]
      %v480 = vld [vmem:[#allocation9 + $0x2c] sm:$0xf]
      %v481 = vld [vmem:[#allocation9 + $0x30] sm:$0xf]
      %v482 = vld [vmem:[#allocation9 + $0x34] sm:$0xf]
      %v483 = vld [vmem:[#allocation9 + $0x38] sm:$0xf]
      %v484 = vld [vmem:[#allocation9 + $0x3c] sm:$0xf]
      %v485 = vld [vmem:[#allocation9 + $0x40] sm:$0xf]
      %v486 = vld [vmem:[#allocation9 + $0x44] sm:$0xf]
      %v487 = vld [vmem:[#allocation9 + $0x48] sm:$0xf]
      %v488 = vld [vmem:[#allocation9 + $0x4c] sm:$0xf]
      %v489 = vld [vmem:[#allocation9 + $0x50] sm:$0xf]
      %v490 = vld [vmem:[#allocation9 + $0x54] sm:$0xf]
      %v491 = vld [vmem:[#allocation9 + $0x58] sm:$0xf]
      %v492 = vld [vmem:[#allocation9 + $0x5c] sm:$0xf]
      %v493 = vld [vmem:[#allocation9 + $0x60] sm:$0xf]
      %v494 = vld [vmem:[#allocation9 + $0x64] sm:$0xf]
      %v495 = vld [vmem:[#allocation9 + $0x68] sm:$0xf]
      %v496 = vld [vmem:[#allocation9 + $0x6c] sm:$0xf]
      %v497 = vld [vmem:[#allocation9 + $0x70] sm:$0xf]
      %v498 = vld [vmem:[#allocation9 + $0x74] sm:$0xf]
      %v499 = vld [vmem:[#allocation9 + $0x78] sm:$0xf]
      %v500 = vld [vmem:[#allocation9 + $0x7c] sm:$0xf]
      %v501 = vld [vmem:[%s4] sm:$0x1]
      %v503 = vlaneseq
      %v504 = vshrl.u32 %v503, 7
      %v505 = vsub.s32 0, %v504
      %v506 = vrot.slane %v501, %v505
      %v540 = vunpack.c.l.b16 %v469
      %v541 = vunpack.c.l.b16 %v470
      %v542 = vunpack.c.l.b16 %v471
      %v543 = vunpack.c.l.b16 %v472
      %v544 = vunpack.c.l.b16 %v473
      %v545 = vunpack.c.l.b16 %v474
      %v546 = vunpack.c.l.b16 %v475
      %v547 = vunpack.c.l.b16 %v476
      %v548 = vunpack.c.l.b16 %v477
      %v549 = vunpack.c.l.b16 %v478
      %v550 = vunpack.c.l.b16 %v479
      %v551 = vunpack.c.l.b16 %v480
      %v552 = vunpack.c.l.b16 %v481
      %v553 = vunpack.c.l.b16 %v482
      %v554 = vunpack.c.l.b16 %v483
      %v555 = vunpack.c.l.b16 %v484
      %v556 = vunpack.c.l.b16 %v485
      %v557 = vunpack.c.l.b16 %v486
      %v558 = vunpack.c.l.b16 %v487
      %v559 = vunpack.c.l.b16 %v488
      %v560 = vunpack.c.l.b16 %v489
      %v561 = vunpack.c.l.b16 %v490
      %v562 = vunpack.c.l.b16 %v491
      %v563 = vunpack.c.l.b16 %v492
      %v564 = vunpack.c.l.b16 %v493
      %v565 = vunpack.c.l.b16 %v494
      %v566 = vunpack.c.l.b16 %v495
      %v567 = vunpack.c.l.b16 %v496
      %v568 = vunpack.c.l.b16 %v497
      %v569 = vunpack.c.l.b16 %v498
      %v570 = vunpack.c.l.b16 %v499
      %v571 = vunpack.c.l.b16 %v500
      %v572 = vpack.c.b16 %v541, %v540
      %v573 = vpack.c.b16 %v543, %v542
      %v574 = vpack.c.b16 %v545, %v544
      %v575 = vpack.c.b16 %v547, %v546
      %v576 = vpack.c.b16 %v549, %v548
      %v577 = vpack.c.b16 %v551, %v550
      %v578 = vpack.c.b16 %v553, %v552
      %v579 = vpack.c.b16 %v555, %v554
      %v580 = vpack.c.b16 %v557, %v556
      %v581 = vpack.c.b16 %v559, %v558
      %v582 = vpack.c.b16 %v561, %v560
      %v583 = vpack.c.b16 %v563, %v562
      %v584 = vpack.c.b16 %v565, %v564
      %v585 = vpack.c.b16 %v567, %v566
      %v586 = vpack.c.b16 %v569, %v568
      %v587 = vpack.c.b16 %v571, %v570
      %604 = vmatprep.subr.bf16.mxu0 0
      %605 = vmatpush1.bf16.msra.mxu0 %v572
      %606 = vmatprep.subr.bf16.mxu0 0
      %607 = vmatpush1.bf16.msra.mxu0 %v573
      %608 = vmatprep.subr.bf16.mxu0 0
      %609 = vmatpush1.bf16.msra.mxu0 %v574
      %610 = vmatprep.subr.bf16.mxu0 0
      %611 = vmatpush1.bf16.msra.mxu0 %v575
      %612 = vmatprep.subr.bf16.mxu0 0
      %613 = vmatpush1.bf16.msra.mxu0 %v576
      %614 = vmatprep.subr.bf16.mxu0 0
      %615 = vmatpush1.bf16.msra.mxu0 %v577
      %616 = vmatprep.subr.bf16.mxu0 0
      %617 = vmatpush1.bf16.msra.mxu0 %v578
      %618 = vmatprep.subr.bf16.mxu0 0
      %619 = vmatpush1.bf16.msra.mxu0 %v579
      %620 = vmatprep.subr.bf16.mxu0 0
      %621 = vmatpush1.bf16.msra.mxu0 %v580
      %622 = vmatprep.subr.bf16.mxu0 0
      %623 = vmatpush1.bf16.msra.mxu0 %v581
      %624 = vmatprep.subr.bf16.mxu0 0
      %625 = vmatpush1.bf16.msra.mxu0 %v582
      %626 = vmatprep.subr.bf16.mxu0 0
      %627 = vmatpush1.bf16.msra.mxu0 %v583
      %628 = vmatprep.subr.bf16.mxu0 0
      %629 = vmatpush1.bf16.msra.mxu0 %v584
      %630 = vmatprep.subr.bf16.mxu0 0
      %631 = vmatpush1.bf16.msra.mxu0 %v585
      %632 = vmatprep.subr.bf16.mxu0 0
      %633 = vmatpush1.bf16.msra.mxu0 %v586
      %634 = vmatprep.subr.bf16.mxu0 0
      %635 = vmatpush1.bf16.msra.mxu0 %v587
      %636 = vmatprep.mubr.bf16.mxu0 %v454
      %637 = vmatmul.mubr.bf16.gmra.mrb[0].mxu0 %v453
      %v638 = vpop.f32.mrb[0].mxu0
      %v639 = vadd.f32 %v506, %v638
      %v640 = vpop.f32.mrb[0].mxu0
      %v641 = vpop.f32.mrb[0].mxu0
      %v642 = vadd.f32 %v506, %v641
      %v643 = vpop.f32.mrb[0].mxu0
      %644 = vmatprep.mubr.bf16.mxu0 %v456
      %645 = vmatmul.mubr.bf16.gmra.mrb[0].mxu0 %v455
      %v646 = vpop.f32.mrb[0].mxu0
      %v647 = vadd.f32 %v506, %v646
      %v648 = vpop.f32.mrb[0].mxu0
      %v649 = vpop.f32.mrb[0].mxu0
      %v650 = vadd.f32 %v506, %v649
      %v651 = vpop.f32.mrb[0].mxu0
      %652 = vmatprep.mubr.bf16.mxu0 %v458
      %653 = vmatmul.mubr.bf16.gmra.mrb[0].mxu0 %v457
      %v654 = vpop.f32.mrb[0].mxu0
      %v655 = vadd.f32 %v506, %v654
      %v656 = vpop.f32.mrb[0].mxu0
      %v657 = vpop.f32.mrb[0].mxu0
      %v658 = vadd.f32 %v506, %v657
      %v659 = vpop.f32.mrb[0].mxu0
      %660 = vmatprep.mubr.bf16.mxu0 %v460
      %661 = vmatmul.mubr.bf16.gmra.mrb[0].mxu0 %v459
      %v662 = vpop.f32.mrb[0].mxu0
      %v663 = vadd.f32 %v506, %v662
      %v664 = vpop.f32.mrb[0].mxu0
      %v665 = vpop.f32.mrb[0].mxu0
      %v666 = vadd.f32 %v506, %v665
      %v667 = vpop.f32.mrb[0].mxu0
      %668 = vmatprep.mubr.bf16.mxu0 %v462
      %669 = vmatmul.mubr.bf16.gmra.mrb[0].mxu0 %v461
      %v670 = vpop.f32.mrb[0].mxu0
      %v671 = vadd.f32 %v506, %v670
      %v672 = vpop.f32.mrb[0].mxu0
      %v673 = vpop.f32.mrb[0].mxu0
      %v674 = vadd.f32 %v506, %v673
      %v675 = vpop.f32.mrb[0].mxu0
      %676 = vmatprep.mubr.bf16.mxu0 %v464
      %677 = vmatmul.mubr.bf16.gmra.mrb[0].mxu0 %v463
      %v678 = vpop.f32.mrb[0].mxu0
      %v679 = vadd.f32 %v506, %v678
      %v680 = vpop.f32.mrb[0].mxu0
      %v681 = vpop.f32.mrb[0].mxu0
      %v682 = vadd.f32 %v506, %v681
      %v683 = vpop.f32.mrb[0].mxu0
      %684 = vmatprep.mubr.bf16.mxu0 %v466
      %685 = vmatmul.mubr.bf16.gmra.mrb[0].mxu0 %v465
      %v686 = vpop.f32.mrb[0].mxu0
      %v687 = vadd.f32 %v506, %v686
      %v688 = vpop.f32.mrb[0].mxu0
      %v689 = vpop.f32.mrb[0].mxu0
      %v690 = vadd.f32 %v506, %v689
      %v691 = vpop.f32.mrb[0].mxu0
      %692 = vmatprep.mubr.bf16.mxu0 %v468
      %693 = vmatmul.mubr.bf16.gmra.mrb[0].mxu0 %v467
      %v694 = vpop.f32.mrb[0].mxu0
      %v695 = vadd.f32 %v506, %v694
      %v696 = vpop.f32.mrb[0].mxu0
      %v697 = vpop.f32.mrb[0].mxu0
      %v698 = vadd.f32 %v506, %v697
      %v699 = vpop.f32.mrb[0].mxu0
      %700 = vdwg.mxu0
      %v701 = vmax.f32 %v639, 0.0
      %v702 = vmax.f32 %v642, 0.0
      %v703 = vmax.f32 %v647, 0.0
      %v704 = vmax.f32 %v650, 0.0
      %v705 = vmax.f32 %v655, 0.0
      %v706 = vmax.f32 %v658, 0.0
      %v707 = vmax.f32 %v663, 0.0
      %v708 = vmax.f32 %v666, 0.0
      %v709 = vmax.f32 %v671, 0.0
      %v710 = vmax.f32 %v674, 0.0
      %v711 = vmax.f32 %v679, 0.0
      %v712 = vmax.f32 %v682, 0.0
      %v713 = vmax.f32 %v687, 0.0
      %v714 = vmax.f32 %v690, 0.0
      %v715 = vmax.f32 %v695, 0.0
      %v716 = vmax.f32 %v698, 0.0
      %v717 = vpack.c.bf16 %v702, %v701
      %v718 = vpack.c.bf16 %v704, %v703
      %v719 = vpack.c.bf16 %v706, %v705
      %v720 = vpack.c.bf16 %v708, %v707
      %v721 = vpack.c.bf16 %v710, %v709
      %v722 = vpack.c.bf16 %v712, %v711
      %v723 = vpack.c.bf16 %v714, %v713
      %v724 = vpack.c.bf16 %v716, %v715
      %v733 = vunpack.c.l.b16 %v717
      %v734 = vunpack.c.h.b16 %v717
      %v735 = vunpack.c.l.b16 %v718
      %v736 = vunpack.c.h.b16 %v718
      %v737 = vunpack.c.l.b16 %v719
      %v738 = vunpack.c.h.b16 %v719
      %v739 = vunpack.c.l.b16 %v720
      %v740 = vunpack.c.h.b16 %v720
      %v741 = vunpack.c.l.b16 %v721
      %v742 = vunpack.c.h.b16 %v721
      %v743 = vunpack.c.l.b16 %v722
      %v744 = vunpack.c.h.b16 %v722
      %v745 = vunpack.c.l.b16 %v723
      %v746 = vunpack.c.h.b16 %v723
      %v747 = vunpack.c.l.b16 %v724
      %v748 = vunpack.c.h.b16 %v724
      %v749 = vpack.c.b16 %v733, %v733
      %v750 = vpack.c.b16 %v734, %v734
      %v751 = vpack.c.b16 %v735, %v735
      %v752 = vpack.c.b16 %v736, %v736
      %v753 = vpack.c.b16 %v737, %v737
      %v754 = vpack.c.b16 %v738, %v738
      %v755 = vpack.c.b16 %v739, %v739
      %v756 = vpack.c.b16 %v740, %v740
      %v757 = vpack.c.b16 %v741, %v741
      %v758 = vpack.c.b16 %v742, %v742
      %v759 = vpack.c.b16 %v743, %v743
      %v760 = vpack.c.b16 %v744, %v744
      %v761 = vpack.c.b16 %v745, %v745
      %v762 = vpack.c.b16 %v746, %v746
      %v763 = vpack.c.b16 %v747, %v747
      %v764 = vpack.c.b16 %v748, %v748
      %781 = vst [vmem:[#allocation11] sm:$0xf] %v749
      %782 = vst [vmem:[#allocation11 + $0x4] sm:$0xf] %v750
      %783 = vst [vmem:[#allocation11 + $0x8] sm:$0xf] %v751
      %784 = vst [vmem:[#allocation11 + $0xc] sm:$0xf] %v752
      %785 = vst [vmem:[#allocation11 + $0x10] sm:$0xf] %v753
      %786 = vst [vmem:[#allocation11 + $0x14] sm:$0xf] %v754
      %787 = vst [vmem:[#allocation11 + $0x18] sm:$0xf] %v755
      %788 = vst [vmem:[#allocation11 + $0x1c] sm:$0xf] %v756
      %789 = vst [vmem:[#allocation11 + $0x20] sm:$0xf] %v757
      %790 = vst [vmem:[#allocation11 + $0x24] sm:$0xf] %v758
      %791 = vst [vmem:[#allocation11 + $0x28] sm:$0xf] %v759
      %792 = vst [vmem:[#allocation11 + $0x2c] sm:$0xf] %v760
      %793 = vst [vmem:[#allocation11 + $0x30] sm:$0xf] %v761
      %794 = vst [vmem:[#allocation11 + $0x34] sm:$0xf] %v762
      %795 = vst [vmem:[#allocation11 + $0x38] sm:$0xf] %v763
      %796 = vst [vmem:[#allocation11 + $0x3c] sm:$0xf] %v764
    $region45: #{tpu_custom_call.1} parent=1 // pred_fallthru
      _
    // Predicated region
    $region46: #{tpu_custom_call.1} parent=1 // pred_check
      _
    $region47: #{tpu_custom_call.1} parent=1 // pred_check_branch
      %798 = sbr.rel (0) target = $region49
    $region48: #{tpu_custom_call.1} parent=1 // pred_region
      %s800 = ssub.s32 1024, 1024
      %801 = vsyncadd [#allocation5], %s800
      %s802 = sshll.u32 [#allocation11], 4
      %s803 = int_to_ptr.vmem [resolvable:$true] %s802
      %808 = dma.vmem_to_hbm [thread:$0]  %s803, 1024, %s5, [#allocation5], 64, 64, 4
    $region49: #{tpu_custom_call.1} parent=1 // pred_fallthru
      _
    // Predicated region
    $region50: #{tpu_custom_call.1} parent=1 // pred_check
      _
    $region51: #{tpu_custom_call.1} parent=1 // pred_check_branch
      %810 = sbr.rel (0) target = $region53
    $region52: #{tpu_custom_call.1} parent=1 // pred_region
      %811 = dma.done [#allocation5], 1024
    $region53: #{tpu_custom_call.1} parent=1 // pred_fallthru
      _
    %812 = vsyncpa [#allocation4], 1
    %813 = vsyncpa [#allocation7], 1
    %814 = vsyncpa [#allocation10], 1
    %815 = vsyncpa [#allocation5], 1

</llo_original>
